<compile_context>
chip_gen: v7x
topology: tpu7x:2x2x1
jax: 0.10.0
libtpu: 0.0.40
codegen_flags: <defaults>
</compile_context>

<pallas_src>
import functools

import jax
import jax.numpy as jnp
from jax.experimental import pallas as pl
from jax.experimental.pallas import tpu as pltpu


def _arm_kernel(x_ref, const_ref, out_ref, xs_ref, ps_ref, *, H, W, padl):
    # x_ref    : (1, G*Cin, HW)         image(s), channels on sublanes, pixels on lanes
    # const_ref: (G*Cout, slab_w)       [ w9 | wa | b1 | b2 ] packed lane-dense slab
    # out_ref  : (1, G*Cout, HW)
    # xs_ref   : VMEM (G*Cin, 2*padl+HW)     zero-padded flattened image(s)
    # ps_ref   : VMEM (9*G*Cin, HW)          staged 3x3 patch matrix
    HW = H * W
    GCin = x_ref.shape[1]
    GCout = out_ref.shape[1]
    K9 = 9 * GCin

    # Stage the flattened image(s) into a zero-padded scratch so every 3x3 tap is a
    # contiguous lane-window load.  Pads are re-zeroed every step (scratch persists
    # across grid iterations; never gate this on program_id with a parallel grid).
    zeros_pad = jnp.zeros((GCin, padl), xs_ref.dtype)
    xs_ref[:, 0:padl] = zeros_pad
    xs_ref[:, padl + HW:2 * padl + HW] = zeros_pad
    xs_ref[:, padl:padl + HW] = x_ref[0]

    # Hoisted W-edge masks (the H-direction halo lands in the zero padding).
    col = jax.lax.broadcasted_iota(jnp.int32, (1, HW), 1) % W
    not_left = col >= 1          # tap reaches one pixel left  -> kill row wrap
    not_right = col < (W - 1)    # tap reaches one pixel right -> kill row wrap

    # Build the (9*G*Cin, HW) patch matrix: one contiguous lane-window load and one
    # sublane-offset store per tap.
    for kh in range(3):
        for kw in range(3):
            dh, dw = kh - 1, kw - 1
            patch = xs_ref[:, pl.ds(padl + dh * W + dw, HW)]
            if dw == -1:
                patch = jnp.where(not_left, patch, 0.0)
            elif dw == 1:
                patch = jnp.where(not_right, patch, 0.0)
            t = kh * 3 + kw
            ps_ref[t * GCin:(t + 1) * GCin, :] = patch

    # Unpack the constant slab (static slices).
    w9 = const_ref[:, 0:K9]                                   # (GCout, 9*GCin)
    wa = const_ref[:, K9:K9 + GCout]                          # (GCout, GCout)
    b1 = const_ref[:, K9 + GCout:K9 + GCout + 1]              # (GCout, 1)
    b2 = const_ref[:, K9 + GCout + 1:K9 + GCout + 2]          # (GCout, 1)

    # Single big-K 3x3-conv matmul, then BN1 bias + ReLU.
    acc = jax.lax.dot_general(
        w9, ps_ref[...],
        dimension_numbers=(((1,), (0,)), ((), ())),
        preferred_element_type=jnp.float32)                   # (GCout, HW)
    feat = jnp.maximum(acc + b1, 0.0)

    # Global average pool first (lane-axis reduce), then the tiny 1x1 attention conv.
    gap = jnp.sum(feat, axis=1, keepdims=True) * (1.0 / HW)   # (GCout, 1)
    z = jax.lax.dot_general(
        wa, gap,
        dimension_numbers=(((1,), (0,)), ((), ())),
        preferred_element_type=jnp.float32)                   # (GCout, 1)
    atten = jax.nn.sigmoid(z + b2)                            # (GCout, 1)

    out_ref[0] = (feat * atten).astype(out_ref.dtype)         # lane-dense store


@jax.jit
def attention_refinement_pallas(x_nchw, w3, s1, b1, wa, s2, b2):
    """x_nchw: (N, Cin, H, W) f32.  w3: (3,3,Cin,Cout) HWIO.  wa: (Cout,Cout) [in,out].
    s1,b1,s2,b2: (Cout,) folded BN scale/bias.  Returns (N, Cout, H, W)."""
    N, Cin, H, W = x_nchw.shape
    Cout = w3.shape[-1]
    HW = H * W
    padl = pl.cdiv(W + 1, 128) * 128           # halo pad, lane-aligned, >= W+1

    # Images per grid step: pack pairs on sublanes (halves grid steps, fills the
    # 8-sublane f32 vreg at Cin=4) only when there is more than one block of work;
    # with N == 2 keep one image per step so a 2-TC chip (v7x) shards them.
    G = 2 if (N > 2 and N % 2 == 0) else 1
    NB = N // G
    GCin, GCout = G * Cin, G * Cout
    K9 = 9 * GCin

    x_flat = x_nchw.reshape(NB, GCin, HW)      # channels-first, pixels on lanes

    # Fold BN1 scale into the 3x3 weights; (tap, Cout, Cin), tap = kh*3+kw.
    w3m = (jnp.transpose(w3, (0, 1, 3, 2)).reshape(9, Cout, Cin)
           * s1.reshape(1, Cout, 1)).astype(jnp.float32)
    # Fold BN2 scale into the 1x1 attention weights; transpose to [out, in].
    wat = (wa * s2.reshape(1, Cout)).T.astype(jnp.float32)

    # Block-diagonal per-image weights matching the staged patch-matrix layout:
    #   patch row = tap*(G*Cin) + img*Cin + cin ; feat row = img*Cout + cout.
    eye = jnp.eye(G, dtype=jnp.float32)
    w9g = jnp.einsum('gh,toc->gothc', eye, w3m).reshape(GCout, K9)
    wag = jnp.einsum('gh,oi->gohi', eye, wat).reshape(GCout, GCout)
    b1g = jnp.tile(b1.astype(jnp.float32), G)
    b2g = jnp.tile(b2.astype(jnp.float32), G)

    # Pack all constants into a single lane-dense slab: [ w9 | wa | b1 | b2 ].
    slab_w = pl.cdiv(K9 + GCout + 2, 128) * 128
    slab = jnp.zeros((GCout, slab_w), jnp.float32)
    slab = slab.at[:, 0:K9].set(w9g)
    slab = slab.at[:, K9:K9 + GCout].set(wag)
    slab = slab.at[:, K9 + GCout].set(b1g)
    slab = slab.at[:, K9 + GCout + 1].set(b2g)

    kernel = functools.partial(_arm_kernel, H=H, W=W, padl=padl)

    # VMEM budget from the actual tiles (double-buffered in/out blocks + scratch),
    # with margin, instead of a flat limit.
    f32 = 4
    vmem_est = (2 * GCin * HW + 2 * GCout * HW      # in/out blocks, 2-deep pipeline
                + GCin * (2 * padl + HW)            # padded-image scratch
                + K9 * HW                           # patch-matrix scratch
                + GCout * slab_w) * f32             # constant slab
    vmem_limit = int(min(max(2 * vmem_est, 8 << 20), 64 << 20))

    grid_spec = pltpu.PrefetchScalarGridSpec(
        num_scalar_prefetch=0,
        grid=(NB,),
        in_specs=[
            pl.BlockSpec((1, GCin, HW), lambda n: (n, 0, 0)),
            pl.BlockSpec((GCout, slab_w), lambda n: (0, 0)),
        ],
        out_specs=pl.BlockSpec((1, GCout, HW), lambda n: (n, 0, 0)),
        scratch_shapes=[
            pltpu.VMEM((GCin, 2 * padl + HW), jnp.float32),
            pltpu.VMEM((K9, HW), jnp.float32),
        ],
    )

    out_flat = pl.pallas_call(
        kernel,
        out_shape=jax.ShapeDtypeStruct((NB, GCout, HW), x_nchw.dtype),
        grid_spec=grid_spec,
        compiler_params=pltpu.CompilerParams(
            dimension_semantics=("parallel",),
            vmem_limit_bytes=vmem_limit),
    )(x_flat, slab)

    return out_flat.reshape(N, Cout, H, W)


def _reference(x_nchw, w3, s1, b1, wa, s2, b2):
    """Pure-JAX reference (same math as the PyTorch module, inference-mode BN)."""
    x = jnp.transpose(x_nchw, (0, 2, 3, 1))
    feat = jax.lax.conv_general_dilated(
        x, w3, window_strides=(1, 1), padding="SAME",
        dimension_numbers=("NHWC", "HWIO", "NHWC"))
    feat = jnp.maximum(feat * s1.reshape(1, 1, 1, -1) + b1.reshape(1, 1, 1, -1),
                       0.0)
    atten = jnp.mean(feat, axis=(1, 2), keepdims=True)
    atten = jnp.einsum("nhwc,cd->nhwd", atten, wa)
    atten = jax.nn.sigmoid(atten * s2.reshape(1, 1, 1, -1)
                           + b2.reshape(1, 1, 1, -1))
    out = feat * atten
    return jnp.transpose(out, (0, 3, 1, 2))


def _make_params(key, Cin, Cout):
    (k_w3, k_wa, k_g1, k_b1, k_g2, k_b2, k_m1, k_v1, k_m2, k_v2) = jax.random.split(key, 10)
    # Conv weights: kaiming_normal_(a=1) -> std = 1/sqrt(fan_in), bias-free.
    fan_in3 = Cin * 3 * 3
    w3 = jax.random.normal(k_w3, (3, 3, Cin, Cout), jnp.float32) / jnp.sqrt(
        jnp.float32(fan_in3))                       # HWIO
    wa = jax.random.normal(k_wa, (Cout, Cout), jnp.float32) / jnp.sqrt(
        jnp.float32(Cout))                          # [in, out]
    # BatchNorm parameters (inference form), folded to per-channel scale/bias.
    eps = 1e-5
    gamma1 = 1.0 + 0.1 * jax.random.normal(k_g1, (Cout,), jnp.float32)
    beta1 = 0.1 * jax.random.normal(k_b1, (Cout,), jnp.float32)
    mean1 = 0.1 * jax.random.normal(k_m1, (Cout,), jnp.float32)
    var1 = jnp.abs(jax.random.normal(k_v1, (Cout,), jnp.float32)) + 0.5
    gamma2 = 1.0 + 0.1 * jax.random.normal(k_g2, (Cout,), jnp.float32)
    beta2 = 0.1 * jax.random.normal(k_b2, (Cout,), jnp.float32)
    mean2 = 0.1 * jax.random.normal(k_m2, (Cout,), jnp.float32)
    var2 = jnp.abs(jax.random.normal(k_v2, (Cout,), jnp.float32)) + 0.5
    s1 = gamma1 / jnp.sqrt(var1 + eps)
    b1 = beta1 - mean1 * s1
    s2 = gamma2 / jnp.sqrt(var2 + eps)
    b2 = beta2 - mean2 * s2
    return w3, s1, b1, wa, s2, b2


if __name__ == "__main__":
    key = jax.random.PRNGKey(0)
    k_x1, k_x2, k_p = jax.random.split(key, 3)
    Cin, Cout, H, W = 4, 8, 16, 16
    w3, s1, b1, wa, s2, b2 = _make_params(k_p, Cin, Cout)

    # Case 1: N=2 -> grid=(2,), one image per grid step (one per TC on v7x).
    x2 = jax.random.normal(k_x1, (2, Cin, H, W), jnp.float32)
    out2 = jax.block_until_ready(attention_refinement_pallas(x2, w3, s1, b1, wa, s2, b2))
    ref2 = _reference(x2, w3, s1, b1, wa, s2, b2)
    assert out2.shape == (2, Cout, H, W)
    assert jnp.allclose(out2, ref2, atol=1e-4, rtol=1e-4), (
        float(jnp.max(jnp.abs(out2 - ref2))))

    # Case 2: N=4 -> exercises the sublane image-pair batching path (G=2, grid=(2,)).
    x4 = jax.random.normal(k_x2, (4, Cin, H, W), jnp.float32)
    out4 = jax.block_until_ready(attention_refinement_pallas(x4, w3, s1, b1, wa, s2, b2))
    ref4 = _reference(x4, w3, s1, b1, wa, s2, b2)
    assert out4.shape == (4, Cout, H, W)
    assert jnp.allclose(out4, ref4, atol=1e-4, rtol=1e-4), (
        float(jnp.max(jnp.abs(out4 - ref4))))

    print("KERNEL_OK")
</pallas_src>

<mosaic_0001>
module attributes {stable_mosaic.version = 11 : i64} {
  func.func @_arm_kernel(%arg0: i32, %arg1: memref<1x4x256xf32, #tpu.memory_space<vmem>>, %arg2: memref<8x128xf32, #tpu.memory_space<vmem>>, %arg3: memref<1x8x256xf32, #tpu.memory_space<vmem>>, %arg4: memref<4x512xf32, #tpu.memory_space<vmem>>, %arg5: memref<36x256xf32, #tpu.memory_space<vmem>>) attributes {dimension_semantics = [#tpu.dimension_semantics<parallel>], iteration_bounds = array<i64: 2>, scalar_prefetch = 0 : i64, scratch_operands = 2 : i64, tpu.core_type = #tpu.core_type<tc>, window_params = [{transform_indices = @transform_0, window_bounds = array<i64: 1, 4, 256>}, {pipeline_mode = #tpu.pipeline_mode<synchronous>, transform_indices = @transform_1, window_bounds = array<i64: 8, 128>}, {transform_indices = @transform_2, window_bounds = array<i64: 1, 8, 256>}]} {
    %cst = arith.constant 0.000000e+00 : f32
    %0 = vector.broadcast %cst : f32 to vector<4x128xf32>
    %c0 = arith.constant 0 : index
    %c0_0 = arith.constant 0 : index
    %1 = vector.load %arg4[%c0, %c0_0] : memref<4x512xf32, #tpu.memory_space<vmem>>, vector<4x128xf32>
    tpu.vector_store %arg4[%c0, %c0_0], %0 {strides = array<i32>} : memref<4x512xf32, #tpu.memory_space<vmem>>, vector<4x128xf32>,
    %c0_1 = arith.constant 0 : index
    %c384 = arith.constant 384 : index
    %2 = vector.load %arg4[%c0_1, %c384] : memref<4x512xf32, #tpu.memory_space<vmem>>, vector<4x128xf32>
    tpu.vector_store %arg4[%c0_1, %c384], %0 {strides = array<i32>} : memref<4x512xf32, #tpu.memory_space<vmem>>, vector<4x128xf32>,
    %c0_2 = arith.constant 0 : index
    %c0_3 = arith.constant 0 : index
    %c0_4 = arith.constant 0 : index
    %3 = vector.load %arg1[%c0_2, %c0_3, %c0_4] : memref<1x4x256xf32, #tpu.memory_space<vmem>>, vector<1x4x256xf32>
    %4 = vector.shape_cast %3 : vector<1x4x256xf32> to vector<4x256xf32>
    %c0_5 = arith.constant 0 : index
    %c128 = arith.constant 128 : index
    %5 = vector.load %arg4[%c0_5, %c128] : memref<4x512xf32, #tpu.memory_space<vmem>>, vector<4x256xf32>
    tpu.vector_store %arg4[%c0_5, %c128], %4 {strides = array<i32>} : memref<4x512xf32, #tpu.memory_space<vmem>>, vector<4x256xf32>,
    %6 = tpu.iota {dimensions = array<i32: 1>} : vector<1x256xi32>
    %c16_i32 = arith.constant 16 : i32
    %c0_i32 = arith.constant 0 : i32
    %7 = arith.cmpi eq, %c16_i32, %c0_i32 : i32
    %c1_i32 = arith.constant 1 : i32
    %8 = arith.select %7, %c1_i32, %c16_i32 : i32
    %9 = vector.broadcast %8 : i32 to vector<1x256xi32>
    %10 = arith.remsi %6, %9 : vector<1x256xi32>
    %c0_i32_6 = arith.constant 0 : i32
    %11 = vector.broadcast %c0_i32_6 : i32 to vector<1x256xi32>
    %12 = arith.cmpi ne, %10, %11 : vector<1x256xi32>
    %c0_i32_7 = arith.constant 0 : i32
    %13 = vector.broadcast %c0_i32_7 : i32 to vector<1x256xi32>
    %14 = arith.cmpi slt, %10, %13 : vector<1x256xi32>
    %c0_i32_8 = arith.constant 0 : i32
    %15 = arith.cmpi slt, %8, %c0_i32_8 : i32
    %16 = vector.broadcast %15 : i1 to vector<1x256xi1>
    %17 = vector.broadcast %16 : vector<1x256xi1> to vector<1x256xi1>
    %18 = arith.xori %14, %17 : vector<1x256xi1>
    %19 = arith.andi %18, %12 : vector<1x256xi1>
    %20 = vector.broadcast %8 : i32 to vector<1x256xi32>
    %21 = arith.addi %10, %20 : vector<1x256xi32>
    %22 = arith.select %19, %21, %10 : vector<1x256xi1>, vector<1x256xi32>
    %c1_i32_9 = arith.constant 1 : i32
    %23 = vector.broadcast %c1_i32_9 : i32 to vector<1x256xi32>
    %24 = arith.cmpi sge, %22, %23 : vector<1x256xi32>
    %c15_i32 = arith.constant 15 : i32
    %25 = vector.broadcast %c15_i32 : i32 to vector<1x256xi32>
    %26 = arith.cmpi slt, %22, %25 : vector<1x256xi32>
    %c0_10 = arith.constant 0 : index
    %c111 = arith.constant 111 : index
    %27 = vector.load %arg4[%c0_10, %c111] : memref<4x512xf32, #tpu.memory_space<vmem>>, vector<4x256xf32>
    %cst_11 = arith.constant 0.000000e+00 : f32
    %28 = vector.shape_cast %24 : vector<1x256xi1> to vector<1x256xi1>
    %29 = vector.broadcast %28 : vector<1x256xi1> to vector<4x256xi1>
    %30 = vector.broadcast %cst_11 : f32 to vector<4x256xf32>
    %31 = arith.select %29, %27, %30 : vector<4x256xi1>, vector<4x256xf32>
    %c0_12 = arith.constant 0 : index
    %c0_13 = arith.constant 0 : index
    %32 = vector.load %arg5[%c0_12, %c0_13] : memref<36x256xf32, #tpu.memory_space<vmem>>, vector<4x256xf32>
    tpu.vector_store %arg5[%c0_12, %c0_13], %31 {strides = array<i32>} : memref<36x256xf32, #tpu.memory_space<vmem>>, vector<4x256xf32>,
    %c0_14 = arith.constant 0 : index
    %c112 = arith.constant 112 : index
    %33 = vector.load %arg4[%c0_14, %c112] : memref<4x512xf32, #tpu.memory_space<vmem>>, vector<4x256xf32>
    %c4 = arith.constant 4 : index
    %c0_15 = arith.constant 0 : index
    %34 = vector.load %arg5[%c4, %c0_15] : memref<36x256xf32, #tpu.memory_space<vmem>>, vector<4x256xf32>
    tpu.vector_store %arg5[%c4, %c0_15], %33 {strides = array<i32>} : memref<36x256xf32, #tpu.memory_space<vmem>>, vector<4x256xf32>,
    %c0_16 = arith.constant 0 : index
    %c113 = arith.constant 113 : index
    %35 = vector.load %arg4[%c0_16, %c113] : memref<4x512xf32, #tpu.memory_space<vmem>>, vector<4x256xf32>
    %cst_17 = arith.constant 0.000000e+00 : f32
    %36 = vector.shape_cast %26 : vector<1x256xi1> to vector<1x256xi1>
    %37 = vector.broadcast %36 : vector<1x256xi1> to vector<4x256xi1>
    %38 = vector.broadcast %cst_17 : f32 to vector<4x256xf32>
    %39 = arith.select %37, %35, %38 : vector<4x256xi1>, vector<4x256xf32>
    %c8 = arith.constant 8 : index
    %c0_18 = arith.constant 0 : index
    %40 = vector.load %arg5[%c8, %c0_18] : memref<36x256xf32, #tpu.memory_space<vmem>>, vector<4x256xf32>
    tpu.vector_store %arg5[%c8, %c0_18], %39 {strides = array<i32>} : memref<36x256xf32, #tpu.memory_space<vmem>>, vector<4x256xf32>,
    %c0_19 = arith.constant 0 : index
    %c127 = arith.constant 127 : index
    %41 = vector.load %arg4[%c0_19, %c127] : memref<4x512xf32, #tpu.memory_space<vmem>>, vector<4x256xf32>
    %cst_20 = arith.constant 0.000000e+00 : f32
    %42 = vector.shape_cast %24 : vector<1x256xi1> to vector<1x256xi1>
    %43 = vector.broadcast %42 : vector<1x256xi1> to vector<4x256xi1>
    %44 = vector.broadcast %cst_20 : f32 to vector<4x256xf32>
    %45 = arith.select %43, %41, %44 : vector<4x256xi1>, vector<4x256xf32>
    %c12 = arith.constant 12 : index
    %c0_21 = arith.constant 0 : index
    %46 = vector.load %arg5[%c12, %c0_21] : memref<36x256xf32, #tpu.memory_space<vmem>>, vector<4x256xf32>
    tpu.vector_store %arg5[%c12, %c0_21], %45 {strides = array<i32>} : memref<36x256xf32, #tpu.memory_space<vmem>>, vector<4x256xf32>,
    %c0_22 = arith.constant 0 : index
    %c128_23 = arith.constant 128 : index
    %47 = vector.load %arg4[%c0_22, %c128_23] : memref<4x512xf32, #tpu.memory_space<vmem>>, vector<4x256xf32>
    %c16 = arith.constant 16 : index
    %c0_24 = arith.constant 0 : index
    %48 = vector.load %arg5[%c16, %c0_24] : memref<36x256xf32, #tpu.memory_space<vmem>>, vector<4x256xf32>
    tpu.vector_store %arg5[%c16, %c0_24], %47 {strides = array<i32>} : memref<36x256xf32, #tpu.memory_space<vmem>>, vector<4x256xf32>,
    %c0_25 = arith.constant 0 : index
    %c129 = arith.constant 129 : index
    %49 = vector.load %arg4[%c0_25, %c129] : memref<4x512xf32, #tpu.memory_space<vmem>>, vector<4x256xf32>
    %cst_26 = arith.constant 0.000000e+00 : f32
    %50 = vector.shape_cast %26 : vector<1x256xi1> to vector<1x256xi1>
    %51 = vector.broadcast %50 : vector<1x256xi1> to vector<4x256xi1>
    %52 = vector.broadcast %cst_26 : f32 to vector<4x256xf32>
    %53 = arith.select %51, %49, %52 : vector<4x256xi1>, vector<4x256xf32>
    %c20 = arith.constant 20 : index
    %c0_27 = arith.constant 0 : index
    %54 = vector.load %arg5[%c20, %c0_27] : memref<36x256xf32, #tpu.memory_space<vmem>>, vector<4x256xf32>
    tpu.vector_store %arg5[%c20, %c0_27], %53 {strides = array<i32>} : memref<36x256xf32, #tpu.memory_space<vmem>>, vector<4x256xf32>,
    %c0_28 = arith.constant 0 : index
    %c143 = arith.constant 143 : index
    %55 = vector.load %arg4[%c0_28, %c143] : memref<4x512xf32, #tpu.memory_space<vmem>>, vector<4x256xf32>
    %cst_29 = arith.constant 0.000000e+00 : f32
    %56 = vector.shape_cast %24 : vector<1x256xi1> to vector<1x256xi1>
    %57 = vector.broadcast %56 : vector<1x256xi1> to vector<4x256xi1>
    %58 = vector.broadcast %cst_29 : f32 to vector<4x256xf32>
    %59 = arith.select %57, %55, %58 : vector<4x256xi1>, vector<4x256xf32>
    %c24 = arith.constant 24 : index
    %c0_30 = arith.constant 0 : index
    %60 = vector.load %arg5[%c24, %c0_30] : memref<36x256xf32, #tpu.memory_space<vmem>>, vector<4x256xf32>
    tpu.vector_store %arg5[%c24, %c0_30], %59 {strides = array<i32>} : memref<36x256xf32, #tpu.memory_space<vmem>>, vector<4x256xf32>,
    %c0_31 = arith.constant 0 : index
    %c144 = arith.constant 144 : index
    %61 = vector.load %arg4[%c0_31, %c144] : memref<4x512xf32, #tpu.memory_space<vmem>>, vector<4x256xf32>
    %c28 = arith.constant 28 : index
    %c0_32 = arith.constant 0 : index
    %62 = vector.load %arg5[%c28, %c0_32] : memref<36x256xf32, #tpu.memory_space<vmem>>, vector<4x256xf32>
    tpu.vector_store %arg5[%c28, %c0_32], %61 {strides = array<i32>} : memref<36x256xf32, #tpu.memory_space<vmem>>, vector<4x256xf32>,
    %c0_33 = arith.constant 0 : index
    %c145 = arith.constant 145 : index
    %63 = vector.load %arg4[%c0_33, %c145] : memref<4x512xf32, #tpu.memory_space<vmem>>, vector<4x256xf32>
    %cst_34 = arith.constant 0.000000e+00 : f32
    %64 = vector.shape_cast %26 : vector<1x256xi1> to vector<1x256xi1>
    %65 = vector.broadcast %64 : vector<1x256xi1> to vector<4x256xi1>
    %66 = vector.broadcast %cst_34 : f32 to vector<4x256xf32>
    %67 = arith.select %65, %63, %66 : vector<4x256xi1>, vector<4x256xf32>
    %c32 = arith.constant 32 : index
    %c0_35 = arith.constant 0 : index
    %68 = vector.load %arg5[%c32, %c0_35] : memref<36x256xf32, #tpu.memory_space<vmem>>, vector<4x256xf32>
    tpu.vector_store %arg5[%c32, %c0_35], %67 {strides = array<i32>} : memref<36x256xf32, #tpu.memory_space<vmem>>, vector<4x256xf32>,
    %c0_36 = arith.constant 0 : index
    %c0_37 = arith.constant 0 : index
    %69 = vector.load %arg2[%c0_36, %c0_37] : memref<8x128xf32, #tpu.memory_space<vmem>>, vector<8x36xf32>
    %c0_38 = arith.constant 0 : index
    %c36 = arith.constant 36 : index
    %70 = vector.load %arg2[%c0_38, %c36] : memref<8x128xf32, #tpu.memory_space<vmem>>, vector<8x8xf32>
    %c0_39 = arith.constant 0 : index
    %c44 = arith.constant 44 : index
    %71 = vector.load %arg2[%c0_39, %c44] : memref<8x128xf32, #tpu.memory_space<vmem>>, vector<8x1xf32>
    %c0_40 = arith.constant 0 : index
    %c45 = arith.constant 45 : index
    %72 = vector.load %arg2[%c0_40, %c45] : memref<8x128xf32, #tpu.memory_space<vmem>>, vector<8x1xf32>
    %c0_41 = arith.constant 0 : index
    %c0_42 = arith.constant 0 : index
    %73 = vector.load %arg5[%c0_41, %c0_42] : memref<36x256xf32, #tpu.memory_space<vmem>>, vector<36x256xf32>
    %cst_43 = arith.constant dense<0.000000e+00> : vector<8x256xf32>
    %74 = tpu.matmul %69, %73, %cst_43 {dimension_numbers = #tpu.dot_dimension_numbers<[1], [0], [0], [1], [0, 0, 1, 1], [], []>} : vector<8x36xf32>, vector<36x256xf32>, vector<8x256xf32> -> vector<8x256xf32>
    %75 = vector.broadcast %71 : vector<8x1xf32> to vector<8x256xf32>
    %76 = arith.addf %74, %75 : vector<8x256xf32>
    %cst_44 = arith.constant 0.000000e+00 : f32
    %77 = vector.broadcast %cst_44 : f32 to vector<8x256xf32>
    %78 = arith.maximumf %76, %77 : vector<8x256xf32>
    %cst_45 = arith.constant dense<0.000000e+00> : vector<8xf32>
    %79 = vector.multi_reduction <add>, %78, %cst_45 [1] : vector<8x256xf32> to vector<8xf32>
    %80 = vector.shape_cast %79 : vector<8xf32> to vector<8x1xf32>
    %cst_46 = arith.constant 3.906250e-03 : f32
    %81 = vector.broadcast %cst_46 : f32 to vector<8x1xf32>
    %82 = arith.mulf %80, %81 : vector<8x1xf32>
    %cst_47 = arith.constant dense<0.000000e+00> : vector<8x1xf32>
    %83 = tpu.matmul %70, %82, %cst_47 {dimension_numbers = #tpu.dot_dimension_numbers<[1], [0], [0], [1], [0, 0, 1, 1], [], []>} : vector<8x8xf32>, vector<8x1xf32>, vector<8x1xf32> -> vector<8x1xf32>
    %84 = arith.addf %83, %72 : vector<8x1xf32>
    %85 = arith.negf %84 : vector<8x1xf32>
    %86 = math.exp %85 : vector<8x1xf32>
    %cst_48 = arith.constant 1.000000e+00 : f32
    %87 = vector.broadcast %cst_48 : f32 to vector<8x1xf32>
    %88 = arith.addf %87, %86 : vector<8x1xf32>
    %89 = arith.divf %87, %88 : vector<8x1xf32>
    %90 = vector.broadcast %89 : vector<8x1xf32> to vector<8x256xf32>
    %91 = arith.mulf %78, %90 : vector<8x256xf32>
    %c0_49 = arith.constant 0 : index
    %c0_50 = arith.constant 0 : index
    %c0_51 = arith.constant 0 : index
    %92 = vector.load %arg3[%c0_49, %c0_50, %c0_51] : memref<1x8x256xf32, #tpu.memory_space<vmem>>, vector<1x8x256xf32>
    %93 = vector.shape_cast %92 : vector<1x8x256xf32> to vector<8x256xf32>
    %94 = vector.shape_cast %91 : vector<8x256xf32> to vector<1x8x256xf32>
    tpu.vector_store %arg3[%c0_49, %c0_50, %c0_51], %94 {strides = array<i32>} : memref<1x8x256xf32, #tpu.memory_space<vmem>>, vector<1x8x256xf32>,
    return
  }
  func.func @transform_0(%arg0: i32) -> (i32, i32, i32) {
    %c0_i32 = arith.constant 0 : i32
    %c0_i32_0 = arith.constant 0 : i32
    %c0_i32_1 = arith.constant 0 : i32
    return %arg0, %c0_i32, %c0_i32_0 : i32, i32, i32
  }
  func.func @transform_1(%arg0: i32) -> (i32, i32) {
    %c0_i32 = arith.constant 0 : i32
    %c0_i32_0 = arith.constant 0 : i32
    %c0_i32_1 = arith.constant 0 : i32
    return %c0_i32, %c0_i32_0 : i32, i32
  }
  func.func @transform_2(%arg0: i32) -> (i32, i32, i32) {
    %c0_i32 = arith.constant 0 : i32
    %c0_i32_0 = arith.constant 0 : i32
    %c0_i32_1 = arith.constant 0 : i32
    return %arg0, %c0_i32, %c0_i32_0 : i32, i32, i32
  }
}

</mosaic_0001>

<llo_original>
// kernel: attention_refinement_pallas.1
$region0: #{attention_refinement_pallas.1}
  #allocation0 [shape = 'u32[]', space=smem, size = 0x4, offset = 0x4, fixed_abs, tag = 'smem constant byte address 0x4 - core index']
  #allocation1 [shape = 'u32[144,128]{1,0:T(1,128)}', space=vmem, size = 0x12000, scoped, tag = 'internal scratch']
  #allocation2 [shape = 'f32[4,512]{1,0:T(4,128)}', space=vmem, size = 0x2000, scoped, tag = 'scratch operand']
  #allocation3 [shape = 'f32[36,256]{1,0:T(8,128)}', space=vmem, size = 0xa000, scoped, tag = 'scratch operand']
  %s0 = inlined_call_operand.vmem [shape: f32[2,4,256], index: 0, kind: input, shape index: {}]
  %s1 = inlined_call_operand.vmem [shape: f32[8,128], index: 1, kind: input, shape index: {}]
  %s2 = inlined_call_operand.vmem [shape: f32[2,8,256], index: 2, kind: output, shape index: {}]
  %s3 = sld [smem:[#allocation0]]
  $region41: #{attention_refinement_pallas.1} parent=0
    _
  %s5 = ssub.s32 1, %s3
  %s6 = scalar_select 0, %s5, %s3
  loop: start=0, step=1, limit=4
  $region2: #{attention_refinement_pallas.1} parent=0 // loop_pre_header
    _
  $region3: #{attention_refinement_pallas.1} parent=0 // loop_header
    %s8 = sphi 0, %s12
    %p9 = scmp.ge.s32.totalorder %s8, 4
    %s18 = sphi 0, %s20
    %s21 = sphi 0, %s18
    %s22 = sphi 0, %s21
    %s38 = sphi 0, %s22
    %s42 = sphi 0, %s42
    %s44 = sphi 0, %s42
    %s45 = sphi 0, %s44
    %s59 = sphi 0, %s45
    %s65 = sphi 0, %s67
    %s68 = sphi 0, %s65
    %s69 = sphi 0, %s68
    %s85 = sphi 0, %s69
  $region4: #{attention_refinement_pallas.1} parent=0 // loop_header_branch
    %11 = sbr.rel (%p9) target = $region8
  $region5: #{attention_refinement_pallas.1} parent=0 // loop_body
    %s13 = ssub.s32 %s8, 1
    %s14 = ssub.s32 %s8, 2
    %s15 = sadd.s32 %s8, 1
    %s16 = ssub.s32 %s8, %s15
    %p17 = scmp.eq.s32.totalorder %s16, 0
    %s19 = sadd.s32 %s18, 1
    %s20 = scalar_select %p17, %s18, %s19
    %p23 = pneg %p17
    %p24 = scmp.eq.s32.totalorder %s8, 1
    %p25 = por %p23, %p24
    %p26 = scmp.ne.s32.totalorder %s18, %s21
    %p27 = scmp.eq.s32.totalorder %s8, 0
    %p28 = por %p26, %p27
    %p29 = scmp.ne.s32.totalorder %s18, %s21
    %p30 = scmp.eq.s32.totalorder %s13, 1
    %p31 = por %p29, %p30
    %p32 = scmp.ne.s32.totalorder %s21, %s22
    %p33 = scmp.eq.s32.totalorder %s13, 0
    %p34 = por %p32, %p33
    %p35 = scmp.ne.s32.totalorder %s21, %s22
    %p36 = scmp.eq.s32.totalorder %s14, 1
    %p37 = por %p35, %p36
    %p39 = scmp.ne.s32.totalorder %s22, %s38
    %p40 = scmp.eq.s32.totalorder %s14, 0
    %p41 = por %p39, %p40
    %s43 = sadd.s32 %s42, 1
    %p46 = scmp.eq.s32.totalorder %s8, 1
    %p47 = scmp.ne.s32.totalorder %s42, %s44
    %p48 = scmp.eq.s32.totalorder %s8, 0
    %p49 = por %p47, %p48
    %p50 = scmp.ne.s32.totalorder %s42, %s44
    %p51 = scmp.eq.s32.totalorder %s13, 1
    %p52 = por %p50, %p51
    %p53 = scmp.ne.s32.totalorder %s44, %s45
    %p54 = scmp.eq.s32.totalorder %s13, 0
    %p55 = por %p53, %p54
    %p56 = scmp.ne.s32.totalorder %s44, %s45
    %p57 = scmp.eq.s32.totalorder %s14, 1
    %p58 = por %p56, %p57
    %p60 = scmp.ne.s32.totalorder %s45, %s59
    %p61 = scmp.eq.s32.totalorder %s14, 0
    %p62 = por %p60, %p61
    %s63 = ssub.s32 %s8, %s15
    %p64 = scmp.eq.s32.totalorder %s63, 0
    %s66 = sadd.s32 %s65, 1
    %s67 = scalar_select %p64, %s65, %s66
    %p70 = pneg %p64
    %p71 = scmp.eq.s32.totalorder %s8, 1
    %p72 = por %p70, %p71
    %p73 = scmp.ne.s32.totalorder %s65, %s68
    %p74 = scmp.eq.s32.totalorder %s8, 0
    %p75 = por %p73, %p74
    %p76 = scmp.ne.s32.totalorder %s65, %s68
    %p77 = scmp.eq.s32.totalorder %s13, 1
    %p78 = por %p76, %p77
    %p79 = scmp.ne.s32.totalorder %s68, %s69
    %p80 = scmp.eq.s32.totalorder %s13, 0
    %p81 = por %p79, %p80
    %p82 = scmp.ne.s32.totalorder %s68, %s69
    %p83 = scmp.eq.s32.totalorder %s14, 1
    %p84 = por %p82, %p83
    %p86 = scmp.ne.s32.totalorder %s69, %s85
    %p87 = scmp.eq.s32.totalorder %s14, 0
    %p88 = por %p86, %p87
    %p89 = scmp.le.s32.totalorder 1, %s8
    %p90 = scmp.lt.s32.totalorder %s8, 3
    %p91 = pnand %p89, %p90
    %p92 = pneg %p91
    // Predicated region
    $region9: #{attention_refinement_pallas.1} parent=5 // pred_check
      _
    $region10: #{attention_refinement_pallas.1} parent=5 // pred_check_branch
      %94 = sbr.rel (%p91) target = $region12
    $region11: #{attention_refinement_pallas.1} parent=5 // pred_region
      %s95 = ssub.s32 %s8, 1
      // Predicated region
      $region13: #{attention_refinement_pallas.1} parent=11 // pred_check
        %p96 = pneg %p55
      $region14: #{attention_refinement_pallas.1} parent=11 // pred_check_branch
        %98 = sbr.rel (%p96) target = $region16
      $region15: #{attention_refinement_pallas.1} parent=11 // pred_region
        _
      $region16: #{attention_refinement_pallas.1} parent=11 // pred_fallthru
        _
    $region12: #{attention_refinement_pallas.1} parent=5 // pred_fallthru
      _
    %p99 = scmp.lt.s32.totalorder %s8, 2
    // Predicated region
    $region17: #{attention_refinement_pallas.1} parent=5 // pred_check
      %p100 = pneg %p99
    $region18: #{attention_refinement_pallas.1} parent=5 // pred_check_branch
      %102 = sbr.rel (%p100) target = $region20
    $region19: #{attention_refinement_pallas.1} parent=5 // pred_region
      // Predicated region
      $region21: #{attention_refinement_pallas.1} parent=19 // pred_check
        %p103 = pneg %p28
      $region22: #{attention_refinement_pallas.1} parent=19 // pred_check_branch
        %105 = sbr.rel (%p103) target = $region24
      $region23: #{attention_refinement_pallas.1} parent=19 // pred_region
        %p106 = scmp.lt.s32.totalorder %s8, 1
        %s107 = scalar_select %p106, %s8, 1
        %s108 = smul.addr %s107, 2
        %s109 = smul.addr %s108, 4
        %s110 = scalar_lea.vmem %s0, %s109
      $region24: #{attention_refinement_pallas.1} parent=19 // pred_fallthru
        _
    $region20: #{attention_refinement_pallas.1} parent=5 // pred_fallthru
      _
    %p111 = scmp.le.s32.totalorder 1, %s8
    %p112 = scmp.lt.s32.totalorder %s8, 3
    %p113 = pnand %p111, %p112
    %p114 = pneg %p113
    // Predicated region
    $region25: #{attention_refinement_pallas.1} parent=5 // pred_check
      _
    $region26: #{attention_refinement_pallas.1} parent=5 // pred_check_branch
      %116 = sbr.rel (%p113) target = $region28
    $region27: #{attention_refinement_pallas.1} parent=5 // pred_region
      %s117 = ssub.s32 %s8, 1
      %p118 = scmp.lt.s32.totalorder %s13, 1
      %s119 = scalar_select %p118, %s13, 1
      %s120 = smul.addr %s119, 2
      %s121 = smul.addr %s120, 4
      %s122 = scalar_lea.vmem %s0, %s121
      %p123 = pneg %p34
      %p124 = pneg %p31
      %p125 = pneg %p55
      %p126 = pneg %p52
      %p127 = pneg %p81
      %p128 = pneg %p78
      %p129 = scmp.lt.s32.totalorder %s13, 1
      %s130 = scalar_select %p129, %s13, 1
      %s131 = smul.addr %s130, 2
      %s132 = smul.addr %s131, 8
      %s133 = scalar_lea.vmem %s2, %s132
      %p134 = scmp.lt.s32.totalorder %s13, 1
      %s135 = scalar_select %p134, %s13, 1
      %s136 = smul.addr %s135, 2
      %s137 = smul.addr %s136, 4
      %s138 = scalar_lea.vmem %s0, %s137
      %p139 = scmp.lt.s32.totalorder %s13, 1
      %s140 = scalar_select %p139, %s13, 1
      %s141 = smul.addr %s140, 2
      %s142 = smul.addr %s141, 8
      %s143 = scalar_lea.vmem %s2, %s142
      %144 = vst [vmem:[#allocation2] sm:$0xf] 0.0
      %145 = vst [vmem:[#allocation2 + $0xc] sm:$0xf] 0.0
      %v146 = vld [vmem:[%s138] sm:$0xff]
      %147 = vst [vmem:[#allocation2 + $0x4] sm:$0xff] %v146
      %v148 = vlaneseq
      %v149 = vand.u32 %v148, 127
      %v150 = vadd.s32 %v149, 128
      %vm151 = vcmp.lt.s32.totalorder %v149, 0
      %v152 = vsub.s32 0, %v149
      %v153 = vsel %vm151, %v152, %v149
      %v154 = vshrl.u32 %v153, 4
      %v155 = vand.u32 %v153, 15
      %v156 = vsub.s32 0, %v155
      %v157 = vsel %vm151, %v156, %v155
      %vm158 = vcmp.lt.s32.totalorder %v150, 0
      %v159 = vsub.s32 0, %v150
      %v160 = vsel %vm158, %v159, %v150
      %v161 = vshrl.u32 %v160, 4
      %v162 = vand.u32 %v160, 15
      %v163 = vsub.s32 0, %v162
      %v164 = vsel %vm158, %v163, %v162
      %vm165 = vcmp.ne.s32.totalorder %v157, 0
      %vm166 = vcmp.ne.s32.totalorder %v164, 0
      %vm167 = vcmp.lt.s32.totalorder %v157, 0
      %vm168 = vcmp.lt.s32.totalorder %v164, 0
      %vm169 = vmand %vm167, %vm165
      %vm170 = vmand %vm168, %vm166
      %v171 = vadd.s32 %v157, 16
      %v172 = vadd.s32 %v164, 16
      %v173 = vsel %vm169, %v171, %v157
      %v174 = vsel %vm170, %v172, %v164
      %vm175 = vcmp.ge.s32.totalorder %v173, 1
      %vm176 = vcmp.ge.s32.totalorder %v174, 1
      %vm177 = vcmp.lt.s32.totalorder %v173, 15
      %vm178 = vcmp.lt.s32.totalorder %v174, 15
      %v179 = vld [vmem:[#allocation2] sm:$0xff]
      %v180 = vld [vmem:[#allocation2 + $0x8] sm:$0xf]
      %v181 = vsel %vm175, 1, 0
      %v182 = vsel %vm176, 1, 0
      %vm183 = vcmp.eq.s32.totalorder %v181, 1
      %vm184 = vcmp.eq.s32.totalorder %v182, 1
      %v187 = vcombine.high %v179, %v179
      %188 = vrot.lane.b32.xlu0 %v179, 17
      %v189 = vpop.permute.xlu0 %188
      %190 = vrot.lane.b32.xlu0 %v187, 17
      %v191 = vpop.permute.xlu0 %190
      %192 = vrot.lane.b32.xlu0 %v180, 17
      %v193 = vpop.permute.xlu0 %192
      %vm194 = vcmask 138240
      %v195 = vsel %vm194, %v189, %v191
      %v196 = vsel %vm194, %v191, %v193
      %v199 = vsel %vm183, %v195, 0.0
      %v200 = vsel %vm184, %v196, 0.0
      %201 = vst [vmem:[#allocation3] sm:$0xf] %v199
      %202 = vst [vmem:[#allocation3 + $0x8] sm:$0xf] %v200
      %v203 = vld [vmem:[#allocation2] sm:$0xff]
      %v204 = vld [vmem:[#allocation2 + $0x8] sm:$0xf]
      %v207 = vcombine.low %v203, %v203
      %v208 = vcombine.low %v204, %v204
      %209 = vrot.lane.b32.xlu0 %v207, 16
      %v210 = vpop.permute.xlu0 %209
      %211 = vrot.lane.b32.xlu0 %v203, 16
      %v212 = vpop.permute.xlu0 %211
      %213 = vrot.lane.b32.xlu0 %v208, 16
      %v214 = vpop.permute.xlu0 %213
      %vm215 = vcmask 130048
      %v216 = vsel %vm215, %v210, %v212
      %v217 = vsel %vm215, %v212, %v214
      %220 = vst [vmem:[#allocation3] sm:$0xf0] %v216
      %221 = vst [vmem:[#allocation3 + $0x8] sm:$0xf0] %v217
      %v222 = vld [vmem:[#allocation2] sm:$0xff]
      %v223 = vld [vmem:[#allocation2 + $0x8] sm:$0xf]
      %v224 = vsel %vm177, 1, 0
      %v225 = vsel %vm178, 1, 0
      %vm226 = vcmp.eq.s32.totalorder %v224, 1
      %vm227 = vcmp.eq.s32.totalorder %v225, 1
      %v230 = vcombine.high %v222, %v222
      %231 = vrot.lane.b32.xlu0 %v222, 15
      %v232 = vpop.permute.xlu0 %231
      %233 = vrot.lane.b32.xlu0 %v230, 15
      %v234 = vpop.permute.xlu0 %233
      %235 = vrot.lane.b32.xlu0 %v223, 15
      %v236 = vpop.permute.xlu0 %235
      %vm237 = vcmask 121856
      %v238 = vsel %vm237, %v232, %v234
      %v239 = vsel %vm237, %v234, %v236
      %v242 = vsel %vm226, %v238, 0.0
      %v243 = vsel %vm227, %v239, 0.0
      %244 = vst [vmem:[#allocation3 + $0x10] sm:$0xf] %v242
      %245 = vst [vmem:[#allocation3 + $0x18] sm:$0xf] %v243
      %v246 = vld [vmem:[#allocation2] sm:$0xff]
      %v247 = vld [vmem:[#allocation2 + $0x8] sm:$0xf]
      %v250 = vcombine.high %v246, %v246
      %251 = vrot.lane.b32.xlu0 %v246, 1
      %v252 = vpop.permute.xlu0 %251
      %253 = vrot.lane.b32.xlu0 %v250, 1
      %v254 = vpop.permute.xlu0 %253
      %255 = vrot.lane.b32.xlu0 %v247, 1
      %v256 = vpop.permute.xlu0 %255
      %vm257 = vcmask 7168
      %v258 = vsel %vm257, %v252, %v254
      %v259 = vsel %vm257, %v254, %v256
      %v262 = vsel %vm183, %v258, 0.0
      %v263 = vsel %vm184, %v259, 0.0
      %v266 = vrot.slane %v262, 4
      %v267 = vrot.slane %v263, 4
      %270 = vst [vmem:[#allocation3 + $0x10] sm:$0xf0] %v266
      %271 = vst [vmem:[#allocation3 + $0x18] sm:$0xf0] %v267
      %v272 = vld [vmem:[#allocation2 + $0x4] sm:$0xff]
      %v274 = vcombine.high %v272, %v272
      %276 = vst [vmem:[#allocation3 + $0x20] sm:$0xf] %v272
      %277 = vst [vmem:[#allocation3 + $0x28] sm:$0xf] %v274
      %v278 = vld [vmem:[#allocation2 + $0x4] sm:$0xff]
      %v279 = vld [vmem:[#allocation2 + $0xc] sm:$0xf]
      %v282 = vcombine.high %v278, %v278
      %283 = vrot.lane.b32.xlu0 %v278, 127
      %v284 = vpop.permute.xlu0 %283
      %285 = vrot.lane.b32.xlu0 %v282, 127
      %v286 = vpop.permute.xlu0 %285
      %287 = vrot.lane.b32.xlu0 %v279, 127
      %v288 = vpop.permute.xlu0 %287
      %vm289 = vcmask 1039360
      %v290 = vsel %vm289, %v284, %v286
      %v291 = vsel %vm289, %v286, %v288
      %v294 = vsel %vm226, %v290, 0.0
      %v295 = vsel %vm227, %v291, 0.0
      %v298 = vrot.slane %v294, 4
      %v299 = vrot.slane %v295, 4
      %302 = vst [vmem:[#allocation3 + $0x20] sm:$0xf0] %v298
      %303 = vst [vmem:[#allocation3 + $0x28] sm:$0xf0] %v299
      %v304 = vld [vmem:[#allocation2 + $0x4] sm:$0xff]
      %v305 = vld [vmem:[#allocation2 + $0xc] sm:$0xf]
      %v308 = vcombine.high %v304, %v304
      %309 = vrot.lane.b32.xlu0 %v304, 113
      %v310 = vpop.permute.xlu0 %309
      %311 = vrot.lane.b32.xlu0 %v308, 113
      %v312 = vpop.permute.xlu0 %311
      %313 = vrot.lane.b32.xlu0 %v305, 113
      %v314 = vpop.permute.xlu0 %313
      %vm315 = vcmask 924672
      %v316 = vsel %vm315, %v310, %v312
      %v317 = vsel %vm315, %v312, %v314
      %v320 = vsel %vm183, %v316, 0.0
      %v321 = vsel %vm184, %v317, 0.0
      %322 = vst [vmem:[#allocation3 + $0x30] sm:$0xf] %v320
      %323 = vst [vmem:[#allocation3 + $0x38] sm:$0xf] %v321
      %v324 = vld [vmem:[#allocation2 + $0x4] sm:$0xff]
      %v325 = vld [vmem:[#allocation2 + $0xc] sm:$0xf]
      %v328 = vcombine.low %v324, %v324
      %v329 = vcombine.low %v325, %v325
      %330 = vrot.lane.b32.xlu0 %v328, 112
      %v331 = vpop.permute.xlu0 %330
      %332 = vrot.lane.b32.xlu0 %v324, 112
      %v333 = vpop.permute.xlu0 %332
      %334 = vrot.lane.b32.xlu0 %v329, 112
      %v335 = vpop.permute.xlu0 %334
      %vm336 = vcmask 916480
      %v337 = vsel %vm336, %v331, %v333
      %v338 = vsel %vm336, %v333, %v335
      %341 = vst [vmem:[#allocation3 + $0x30] sm:$0xf0] %v337
      %342 = vst [vmem:[#allocation3 + $0x38] sm:$0xf0] %v338
      %v343 = vld [vmem:[#allocation2 + $0x4] sm:$0xff]
      %v344 = vld [vmem:[#allocation2 + $0xc] sm:$0xf]
      %v347 = vcombine.high %v343, %v343
      %348 = vrot.lane.b32.xlu0 %v343, 111
      %v349 = vpop.permute.xlu0 %348
      %350 = vrot.lane.b32.xlu0 %v347, 111
      %v351 = vpop.permute.xlu0 %350
      %352 = vrot.lane.b32.xlu0 %v344, 111
      %v353 = vpop.permute.xlu0 %352
      %vm354 = vcmask 908288
      %v355 = vsel %vm354, %v349, %v351
      %v356 = vsel %vm354, %v351, %v353
      %v359 = vsel %vm226, %v355, 0.0
      %v360 = vsel %vm227, %v356, 0.0
      %361 = vst [vmem:[#allocation3 + $0x40] sm:$0xf] %v359
      %362 = vst [vmem:[#allocation3 + $0x48] sm:$0xf] %v360
      %v363 = vld [vmem:[%s1] sm:$0xff]
      %v364 = vld [vmem:[#allocation3] sm:$0xff]
      %v365 = vld [vmem:[#allocation3 + $0x8] sm:$0xff]
      %v366 = vld [vmem:[#allocation3 + $0x10] sm:$0xff]
      %v367 = vld [vmem:[#allocation3 + $0x18] sm:$0xff]
      %v368 = vld [vmem:[#allocation3 + $0x20] sm:$0xff]
      %v369 = vld [vmem:[#allocation3 + $0x28] sm:$0xff]
      %v370 = vld [vmem:[#allocation3 + $0x30] sm:$0xff]
      %v371 = vld [vmem:[#allocation3 + $0x38] sm:$0xff]
      %v372 = vld [vmem:[#allocation3 + $0x40] sm:$0xf]
      %v373 = vld [vmem:[#allocation3 + $0x48] sm:$0xf]
      %375 = vset.pattern.permute.xlu0 44
      %376 = vperm.xlu0 %375, %v363
      %v377 = vpop.permute.xlu0 %376
      %vm379 = vcmask 293888
      %v380 = vsel %vm379, %v363, 0
      %vm382 = vcmask 1043456
      %v384 = vsel %vm382, %v372, 0
      %v387 = vsel %vm382, %v373, 0
      %389 = vmatprep.subr.mxu0 %v365
      %390 = vmatpush1.msra.mxu0 %v364
      %391 = vmatprep.subr.mxu0 %v367
      %392 = vmatpush1.msra.mxu0 %v366
      %393 = vmatprep.subr.mxu0 %v369
      %394 = vmatpush1.msra.mxu0 %v368
      %395 = vmatprep.subr.mxu0 %v371
      %396 = vmatpush1.msra.mxu0 %v370
      %397 = vmatprep.subr.mxu0 %v387
      %398 = vmatpush1.msra.mxu0 %v384
      %399 = vmatprep.subr.mxu0 0.0
      %400 = vmatpush1.msra.mxu0 0.0
      %401 = vmatprep.subr.mxu0 0.0
      %402 = vmatpush1.msra.mxu0 0.0
      %403 = vmatprep.subr.mxu0 0.0
      %404 = vmatpush1.msra.mxu0 0.0
      %405 = vmatprep.subr.mxu0 0.0
      %406 = vmatpush1.msra.mxu0 0.0
      %407 = vmatprep.subr.mxu0 0.0
      %408 = vmatpush1.msra.mxu0 0.0
      %409 = vmatprep.subr.mxu0 0.0
      %410 = vmatpush1.msra.mxu0 0.0
      %411 = vmatprep.subr.mxu0 0.0
      %412 = vmatpush1.msra.mxu0 0.0
      %413 = vmatprep.subr.mxu0 0.0
      %414 = vmatpush1.msra.mxu0 0.0
      %415 = vmatprep.subr.mxu0 0.0
      %416 = vmatpush1.msra.mxu0 0.0
      %417 = vmatprep.subr.mxu0 0.0
      %418 = vmatpush1.msra.mxu0 0.0
      %419 = vmatprep.subr.mxu0 0.0
      %420 = vmatpush1.msra.mxu0 0.0
      %421 = vmatprep.subr.mxu0 0.0
      %422 = vmatpush1.msra.mxu0 0.0
      %423 = vmatprep.subr.mxu0 0.0
      %424 = vmatpush1.msra.mxu0 0.0
      %425 = vmatprep.subr.mxu0 0.0
      %426 = vmatpush1.msra.mxu0 0.0
      %427 = vmatprep.subr.mxu0 0.0
      %428 = vmatpush1.msra.mxu0 0.0
      %429 = vmatprep.subr.mxu0 0.0
      %430 = vmatpush1.msra.mxu0 0.0
      %431 = vmatprep.subr.mxu0 0.0
      %432 = vmatpush1.msra.mxu0 0.0
      %433 = vmatprep.subr.mxu0 0.0
      %434 = vmatpush1.msra.mxu0 0.0
      %435 = vmatprep.subr.mxu0 0.0
      %436 = vmatpush1.msra.mxu0 0.0
      %437 = vmatprep.subr.mxu0 0.0
      %438 = vmatpush1.msra.mxu0 0.0
      %439 = vmatprep.subr.mxu0 0.0
      %440 = vmatpush1.msra.mxu0 0.0
      %441 = vmatprep.subr.mxu0 0.0
      %442 = vmatpush1.msra.mxu0 0.0
      %443 = vmatprep.subr.mxu0 0.0
      %444 = vmatpush1.msra.mxu0 0.0
      %445 = vmatprep.subr.mxu0 0.0
      %446 = vmatpush1.msra.mxu0 0.0
      %447 = vmatprep.subr.mxu0 0.0
      %448 = vmatpush1.msra.mxu0 0.0
      %449 = vmatprep.subr.mxu0 0.0
      %450 = vmatpush1.msra.mxu0 0.0
      %451 = vmatprep.subr.mxu0 0.0
      %452 = vmatpush1.msra.mxu0 0.0
      %453 = vmatprep.mubr.f32.mxu0 0.0
      %454 = vmatmul.mubr.f32.gmra.mrb[0].mxu0 %v380
      %v455 = vpop.f32.mrb[0].mxu0
      %v456 = vadd.f32 %v377, %v455
      %v457 = vpop.f32.mrb[0].mxu0
      %v458 = vadd.f32 %v377, %v457
      %459 = vdwg.mxu0
      %v460 = vmax.f32 %v456, 0.0
      %v461 = vmax.f32 %v458, 0.0
      %v462 = vadd.f32 %v460, %v461
      %463 = vadd.xlane.f32.xlu0 %v462
      %v464 = vpop.xlane.xlu0 %463
      %v465 = vmul.f32 %v464, 0.00390625
      %466 = vrot.lane.b32.xlu0 %v363, 92
      %v467 = vpop.permute.xlu0 %466
      %468 = vrot.lane.b32.xlu0 %v363, 83
      %v469 = vpop.permute.xlu0 %468
      %vm471 = vcmask 64512
      %v472 = vsel %vm471, %v467, 0
      %474 = vmatprep.subr.mxu0 0.0
      %475 = vmatpush1.msra.mxu0 %v465
      %476 = vmatprep.subr.mxu0 0.0
      %477 = vmatpush1.msra.mxu0 0.0
      %478 = vmatprep.subr.mxu0 0.0
      %479 = vmatpush1.msra.mxu0 0.0
      %480 = vmatprep.subr.mxu0 0.0
      %481 = vmatpush1.msra.mxu0 0.0
      %482 = vmatprep.subr.mxu0 0.0
      %483 = vmatpush1.msra.mxu0 0.0
      %484 = vmatprep.subr.mxu0 0.0
      %485 = vmatpush1.msra.mxu0 0.0
      %486 = vmatprep.subr.mxu0 0.0
      %487 = vmatpush1.msra.mxu0 0.0
      %488 = vmatprep.subr.mxu0 0.0
      %489 = vmatpush1.msra.mxu0 0.0
      %490 = vmatprep.subr.mxu0 0.0
      %491 = vmatpush1.msra.mxu0 0.0
      %492 = vmatprep.subr.mxu0 0.0
      %493 = vmatpush1.msra.mxu0 0.0
      %494 = vmatprep.subr.mxu0 0.0
      %495 = vmatpush1.msra.mxu0 0.0
      %496 = vmatprep.subr.mxu0 0.0
      %497 = vmatpush1.msra.mxu0 0.0
      %498 = vmatprep.subr.mxu0 0.0
      %499 = vmatpush1.msra.mxu0 0.0
      %500 = vmatprep.subr.mxu0 0.0
      %501 = vmatpush1.msra.mxu0 0.0
      %502 = vmatprep.subr.mxu0 0.0
      %503 = vmatpush1.msra.mxu0 0.0
      %504 = vmatprep.subr.mxu0 0.0
      %505 = vmatpush1.msra.mxu0 0.0
      %506 = vmatprep.subr.mxu0 0.0
      %507 = vmatpush1.msra.mxu0 0.0
      %508 = vmatprep.subr.mxu0 0.0
      %509 = vmatpush1.msra.mxu0 0.0
      %510 = vmatprep.subr.mxu0 0.0
      %511 = vmatpush1.msra.mxu0 0.0
      %512 = vmatprep.subr.mxu0 0.0
      %513 = vmatpush1.msra.mxu0 0.0
      %514 = vmatprep.subr.mxu0 0.0
      %515 = vmatpush1.msra.mxu0 0.0
      %516 = vmatprep.subr.mxu0 0.0
      %517 = vmatpush1.msra.mxu0 0.0
      %518 = vmatprep.subr.mxu0 0.0
      %519 = vmatpush1.msra.mxu0 0.0
      %520 = vmatprep.subr.mxu0 0.0
      %521 = vmatpush1.msra.mxu0 0.0
      %522 = vmatprep.subr.mxu0 0.0
      %523 = vmatpush1.msra.mxu0 0.0
      %524 = vmatprep.subr.mxu0 0.0
      %525 = vmatpush1.msra.mxu0 0.0
      %526 = vmatprep.subr.mxu0 0.0
      %527 = vmatpush1.msra.mxu0 0.0
      %528 = vmatprep.subr.mxu0 0.0
      %529 = vmatpush1.msra.mxu0 0.0
      %530 = vmatprep.subr.mxu0 0.0
      %531 = vmatpush1.msra.mxu0 0.0
      %532 = vmatprep.subr.mxu0 0.0
      %533 = vmatpush1.msra.mxu0 0.0
      %534 = vmatprep.subr.mxu0 0.0
      %535 = vmatpush1.msra.mxu0 0.0
      %536 = vmatprep.subr.mxu0 0.0
      %537 = vmatpush1.msra.mxu0 0.0
      %538 = vmatprep.mubr.f32.mxu0 0.0
      %539 = vmatmul.mubr.f32.gmra.mrb[0].mxu0 %v472
      %v540 = vpop.f32.mrb[0].mxu0
      %v541 = vadd.f32 %v469, %v540
      %v542 = vpop.f32.mrb[0].mxu0
      %543 = vdwg.mxu0
      %v544 = vxor.u32 %v541, 2147483648
      %v545 = vmul.f32 %v544, 1.442695
      %v546 = vpow.pop %v545
      %v547 = vadd.f32 %v546, 1.0
      %v548 = vrcp.pop %v547
      %v549 = vmul.f32 1.0, %v548
      %551 = vset.pattern.permute.xlu0 0
      %552 = vperm.xlu0 %551, %v549
      %v553 = vpop.permute.xlu0 %552
      %v555 = vmul.f32 %v460, %v553
      %v556 = vmul.f32 %v461, %v553
      %557 = vst [vmem:[%s143] sm:$0xff] %v555
      %558 = vst [vmem:[%s143 + $0x8] sm:$0xff] %v556
      %p559 = scmp.lt.s32.totalorder %s13, 1
      %s560 = scalar_select %p559, %s13, 1
      %s561 = smul.addr %s560, 2
      %s562 = smul.addr %s561, 8
      %s563 = scalar_lea.vmem %s2, %s562
      // Predicated region
      $region29: #{attention_refinement_pallas.1} parent=27 // pred_check
        %p564 = pneg %p78
      $region30: #{attention_refinement_pallas.1} parent=27 // pred_check_branch
        %566 = sbr.rel (%p564) target = $region32
      $region31: #{attention_refinement_pallas.1} parent=27 // pred_region
        _
      $region32: #{attention_refinement_pallas.1} parent=27 // pred_fallthru
        _
    $region28: #{attention_refinement_pallas.1} parent=5 // pred_fallthru
      _
    %p567 = scmp.le.s32.totalorder 2, %s8
    // Predicated region
    $region33: #{attention_refinement_pallas.1} parent=5 // pred_check
      %p568 = pneg %p567
    $region34: #{attention_refinement_pallas.1} parent=5 // pred_check_branch
      %570 = sbr.rel (%p568) target = $region36
    $region35: #{attention_refinement_pallas.1} parent=5 // pred_region
      %s571 = ssub.s32 %s8, 2
      // Predicated region
      $region37: #{attention_refinement_pallas.1} parent=35 // pred_check
        %p572 = pneg %p84
      $region38: #{attention_refinement_pallas.1} parent=35 // pred_check_branch
        %574 = sbr.rel (%p572) target = $region40
      $region39: #{attention_refinement_pallas.1} parent=35 // pred_region
        %p575 = scmp.lt.s32.totalorder %s14, 1
        %s576 = scalar_select %p575, %s14, 1
        %s577 = smul.addr %s576, 2
        %s578 = smul.addr %s577, 8
        %s579 = scalar_lea.vmem %s2, %s578
      $region40: #{attention_refinement_pallas.1} parent=35 // pred_fallthru
        _
    $region36: #{attention_refinement_pallas.1} parent=5 // pred_fallthru
      _
  $region6: #{attention_refinement_pallas.1} parent=0 // loop_footer
    %s12 = sadd.s32 1, %s8
  $region7: #{attention_refinement_pallas.1} parent=0 // loop_footer_branch
    %7 = sbr.rel target = $region3
  $region8: #{attention_refinement_pallas.1} parent=0 // loop_exit
    _

</llo_original>
